<compile_context>
chip_gen: v6e
topology: v6e:2x2x1
jax: 0.10.0
libtpu: 0.0.40
codegen_flags: <defaults>
</compile_context>

<pallas_src>
import functools

import jax
import jax.numpy as jnp
from jax.experimental import pallas as pl
from jax.experimental.pallas import tpu as pltpu


# --------------------------------------------------------------------------
# Kernel 1: lane-dense per-channel partial sum and sum-of-squares.
# x_ref: (C, thw) tile of one batch element; sum/sq refs: (C, LW) accumulators
# (LW = 128 normally, 1 only for irregular spatial sizes).
# --------------------------------------------------------------------------
def _stats_kernel(x_ref, sum_ref, sq_ref):
    @pl.when(pl.program_id(1) == 0)
    def _():
        sum_ref[...] = jnp.zeros_like(sum_ref)
        sq_ref[...] = jnp.zeros_like(sq_ref)

    x = x_ref[...].astype(jnp.float32)          # (C, thw)
    lw = sum_ref.shape[-1]
    thw = x.shape[-1]

    if lw == 1:
        # Fallback for H*W not a multiple of 128: one cross-lane reduce/tile.
        sum_ref[...] += jnp.sum(x, axis=-1, keepdims=True)
        sq_ref[...] += jnp.sum(x * x, axis=-1, keepdims=True)
    else:
        # Lane-dense accumulation: plain VPU adds on (C, 128) chunks; the
        # final collapse over the 128 lanes happens once in the wrapper.
        acc_s = x[:, 0:lw]
        acc_q = acc_s * acc_s
        for j in range(1, thw // lw):
            chunk = x[:, j * lw:(j + 1) * lw]
            acc_s = acc_s + chunk
            acc_q = acc_q + chunk * chunk
        sum_ref[...] += acc_s
        sq_ref[...] += acc_q


# --------------------------------------------------------------------------
# Kernel 2: y = x * scale + shift (per-channel scale/shift pre-folded).
# --------------------------------------------------------------------------
def _normalize_kernel(x_ref, scale_ref, shift_ref, o_ref):
    x = x_ref[...].astype(jnp.float32)                      # (C, thw)
    y = x * scale_ref[...] + shift_ref[...]                 # (C, 1) broadcast
    o_ref[...] = y.astype(o_ref.dtype)


def _pick_spatial_tile(hw, c, itemsize):
    """Largest lane-dense spatial tile that divides hw and fits VMEM budget."""
    if hw % 128 != 0:
        return hw  # small/irregular spatial extent: use the full dim
    # ~3 MiB per tile keeps 2x(in)+2x(out) double buffers well under the
    # 32 MiB scoped-VMEM budget on every generation (incl. v7x's 64 MiB VMEM).
    budget_elems = (3 * 1024 * 1024) // max(int(itemsize), 4)
    thw = min(hw, 8192, max(128, (budget_elems // max(c, 1)) // 128 * 128))
    while hw % thw != 0:
        thw -= 128
    return thw


def batch_norm_sync_forward(x_nchw, weight, bias, *, eps=1e-5):
    """Training-mode synchronized batch norm forward (single device).

    x_nchw : (N, C, H, W)
    weight : (C,)
    bias   : (C,)
    """
    N, C, H, W = x_nchw.shape
    HW = H * W
    M = N * HW

    x3 = x_nchw.reshape(N, C, HW)  # free reshape, native NCHW layout
    thw = _pick_spatial_tile(HW, C, jnp.dtype(x_nchw.dtype).itemsize)
    T = HW // thw
    LW = 128 if (HW % 128 == 0) else 1
    vmem_params = dict(vmem_limit_bytes=32 * 1024 * 1024)

    # ---- pass 1: per-channel partial sums --------------------------------
    part_sum, part_sq = pl.pallas_call(
        _stats_kernel,
        out_shape=(
            jax.ShapeDtypeStruct((N, C, LW), jnp.float32),
            jax.ShapeDtypeStruct((N, C, LW), jnp.float32),
        ),
        grid_spec=pltpu.PrefetchScalarGridSpec(
            num_scalar_prefetch=0,
            grid=(N, T),
            in_specs=[pl.BlockSpec((None, C, thw), lambda n, t: (n, 0, t))],
            out_specs=(
                pl.BlockSpec((None, C, LW), lambda n, t: (n, 0, 0)),
                pl.BlockSpec((None, C, LW), lambda n, t: (n, 0, 0)),
            ),
        ),
        compiler_params=pltpu.CompilerParams(
            dimension_semantics=("parallel", "arbitrary"), **vmem_params),
    )(x3)

    # ---- fold statistics into per-channel scale/shift (tiny (C,) math) ----
    inv_m = jnp.float32(1.0 / M)
    ch_sum = jnp.sum(part_sum, axis=(0, 2))
    ch_sq = jnp.sum(part_sq, axis=(0, 2))
    mean = ch_sum * inv_m
    var = jnp.maximum(ch_sq * inv_m - mean * mean, 0.0)  # biased var, clamped
    inv_std = jax.lax.rsqrt(var + jnp.float32(eps))
    scale_c = weight.astype(jnp.float32) * inv_std
    shift_c = bias.astype(jnp.float32) - mean * scale_c
    scale = scale_c.reshape(C, 1)
    shift = shift_c.reshape(C, 1)

    # ---- pass 2: normalize + affine ---------------------------------------
    y3 = pl.pallas_call(
        _normalize_kernel,
        out_shape=jax.ShapeDtypeStruct((N, C, HW), x_nchw.dtype),
        grid_spec=pltpu.PrefetchScalarGridSpec(
            num_scalar_prefetch=0,
            grid=(N, T),
            in_specs=[
                pl.BlockSpec((None, C, thw), lambda n, t: (n, 0, t)),
                pl.BlockSpec((C, 1), lambda n, t: (0, 0)),
                pl.BlockSpec((C, 1), lambda n, t: (0, 0)),
            ],
            out_specs=pl.BlockSpec((None, C, thw), lambda n, t: (n, 0, t)),
        ),
        compiler_params=pltpu.CompilerParams(
            dimension_semantics=("parallel", "parallel"), **vmem_params),
    )(x3, scale, shift)

    return y3.reshape(N, C, H, W)


def _reference(x, weight, bias, eps=1e-5):
    # pure-JAX reference of torch BatchNorm training forward (biased var)
    mean = jnp.mean(x, axis=(0, 2, 3), keepdims=True)
    var = jnp.mean(jnp.square(x - mean), axis=(0, 2, 3), keepdims=True)
    w = weight.reshape(1, -1, 1, 1)
    b = bias.reshape(1, -1, 1, 1)
    return (x - mean) / jnp.sqrt(var + eps) * w + b


if __name__ == "__main__":
    key = jax.random.PRNGKey(0)
    k_x, k_w = jax.random.split(key)

    N, C, H, W = 2, 4, 16, 16
    num_features = C
    eps = 1e-5

    # deterministic parameter init matching reset_parameters():
    #   weight.uniform_() in [0, 1), bias zero
    x = jax.random.normal(k_x, (N, C, H, W), dtype=jnp.float32)
    weight = jax.random.uniform(k_w, (num_features,), dtype=jnp.float32)
    bias = jnp.zeros((num_features,), dtype=jnp.float32)

    fwd = jax.jit(functools.partial(batch_norm_sync_forward, eps=eps))
    y = jax.block_until_ready(fwd(x, weight, bias))

    y_ref = _reference(x, weight, bias, eps=eps)
    assert y.shape == (N, C, H, W)
    assert jnp.allclose(y, y_ref, atol=1e-4, rtol=1e-4), "mismatch vs reference"

    print("KERNEL_OK")
</pallas_src>

<mosaic_0001>
module attributes {stable_mosaic.version = 11 : i64} {
  func.func @_stats_kernel(%arg0: i32, %arg1: i32, %arg2: memref<1x4x256xf32, #tpu.memory_space<vmem>>, %arg3: memref<1x4x128xf32, #tpu.memory_space<vmem>>, %arg4: memref<1x4x128xf32, #tpu.memory_space<vmem>>) attributes {dimension_semantics = [#tpu.dimension_semantics<parallel>, #tpu.dimension_semantics<arbitrary>], iteration_bounds = array<i64: 2, 1>, scalar_prefetch = 0 : i64, scratch_operands = 0 : i64, tpu.core_type = #tpu.core_type<tc>, window_params = [{transform_indices = @transform_0, window_bounds = array<i64: 1, 4, 256>}, {transform_indices = @transform_1, window_bounds = array<i64: 1, 4, 128>}, {transform_indices = @transform_2, window_bounds = array<i64: 1, 4, 128>}]} {
    %c0_i32 = arith.constant 0 : i32
    %0 = arith.cmpi eq, %arg1, %c0_i32 : i32
    %1 = arith.extui %0 : i1 to i32
    %c0_i32_0 = arith.constant 0 : i32
    %2 = arith.cmpi ne, %1, %c0_i32_0 : i32
    scf.if %2 {
      %cst = arith.constant 0.000000e+00 : f32
      %23 = vector.broadcast %cst : f32 to vector<4x128xf32>
      %c0_15 = arith.constant 0 : index
      %c0_16 = arith.constant 0 : index
      %c0_17 = arith.constant 0 : index
      %24 = vector.load %arg3[%c0_15, %c0_16, %c0_17] : memref<1x4x128xf32, #tpu.memory_space<vmem>>, vector<1x4x128xf32>
      %25 = vector.shape_cast %24 : vector<1x4x128xf32> to vector<4x128xf32>
      %26 = vector.shape_cast %23 : vector<4x128xf32> to vector<1x4x128xf32>
      tpu.vector_store %arg3[%c0_15, %c0_16, %c0_17], %26 {strides = array<i32>} : memref<1x4x128xf32, #tpu.memory_space<vmem>>, vector<1x4x128xf32>,
      %cst_18 = arith.constant 0.000000e+00 : f32
      %27 = vector.broadcast %cst_18 : f32 to vector<4x128xf32>
      %c0_19 = arith.constant 0 : index
      %c0_20 = arith.constant 0 : index
      %c0_21 = arith.constant 0 : index
      %28 = vector.load %arg4[%c0_19, %c0_20, %c0_21] : memref<1x4x128xf32, #tpu.memory_space<vmem>>, vector<1x4x128xf32>
      %29 = vector.shape_cast %28 : vector<1x4x128xf32> to vector<4x128xf32>
      %30 = vector.shape_cast %27 : vector<4x128xf32> to vector<1x4x128xf32>
      tpu.vector_store %arg4[%c0_19, %c0_20, %c0_21], %30 {strides = array<i32>} : memref<1x4x128xf32, #tpu.memory_space<vmem>>, vector<1x4x128xf32>,
    } else {
    }
    %c0 = arith.constant 0 : index
    %c0_1 = arith.constant 0 : index
    %c0_2 = arith.constant 0 : index
    %3 = vector.load %arg2[%c0, %c0_1, %c0_2] : memref<1x4x256xf32, #tpu.memory_space<vmem>>, vector<1x4x256xf32>
    %4 = vector.shape_cast %3 : vector<1x4x256xf32> to vector<4x256xf32>
    %5 = vector.extract_strided_slice %4 {offsets = [0, 0], sizes = [4, 128], strides = [1, 1]} : vector<4x256xf32> to vector<4x128xf32>
    %6 = arith.mulf %5, %5 : vector<4x128xf32>
    %7 = vector.extract_strided_slice %4 {offsets = [0, 128], sizes = [4, 128], strides = [1, 1]} : vector<4x256xf32> to vector<4x128xf32>
    %8 = arith.addf %5, %7 : vector<4x128xf32>
    %9 = arith.mulf %7, %7 : vector<4x128xf32>
    %10 = arith.addf %6, %9 : vector<4x128xf32>
    %c0_3 = arith.constant 0 : index
    %c0_4 = arith.constant 0 : index
    %c0_5 = arith.constant 0 : index
    %11 = vector.load %arg3[%c0_3, %c0_4, %c0_5] : memref<1x4x128xf32, #tpu.memory_space<vmem>>, vector<1x4x128xf32>
    %12 = vector.shape_cast %11 : vector<1x4x128xf32> to vector<4x128xf32>
    %13 = arith.addf %12, %8 : vector<4x128xf32>
    %c0_6 = arith.constant 0 : index
    %c0_7 = arith.constant 0 : index
    %c0_8 = arith.constant 0 : index
    %14 = vector.load %arg3[%c0_6, %c0_7, %c0_8] : memref<1x4x128xf32, #tpu.memory_space<vmem>>, vector<1x4x128xf32>
    %15 = vector.shape_cast %14 : vector<1x4x128xf32> to vector<4x128xf32>
    %16 = vector.shape_cast %13 : vector<4x128xf32> to vector<1x4x128xf32>
    tpu.vector_store %arg3[%c0_6, %c0_7, %c0_8], %16 {strides = array<i32>} : memref<1x4x128xf32, #tpu.memory_space<vmem>>, vector<1x4x128xf32>,
    %c0_9 = arith.constant 0 : index
    %c0_10 = arith.constant 0 : index
    %c0_11 = arith.constant 0 : index
    %17 = vector.load %arg4[%c0_9, %c0_10, %c0_11] : memref<1x4x128xf32, #tpu.memory_space<vmem>>, vector<1x4x128xf32>
    %18 = vector.shape_cast %17 : vector<1x4x128xf32> to vector<4x128xf32>
    %19 = arith.addf %18, %10 : vector<4x128xf32>
    %c0_12 = arith.constant 0 : index
    %c0_13 = arith.constant 0 : index
    %c0_14 = arith.constant 0 : index
    %20 = vector.load %arg4[%c0_12, %c0_13, %c0_14] : memref<1x4x128xf32, #tpu.memory_space<vmem>>, vector<1x4x128xf32>
    %21 = vector.shape_cast %20 : vector<1x4x128xf32> to vector<4x128xf32>
    %22 = vector.shape_cast %19 : vector<4x128xf32> to vector<1x4x128xf32>
    tpu.vector_store %arg4[%c0_12, %c0_13, %c0_14], %22 {strides = array<i32>} : memref<1x4x128xf32, #tpu.memory_space<vmem>>, vector<1x4x128xf32>,
    return
  }
  func.func @transform_0(%arg0: i32, %arg1: i32) -> (i32, i32, i32) {
    %c0_i32 = arith.constant 0 : i32
    %c0_i32_0 = arith.constant 0 : i32
    return %arg0, %c0_i32, %arg1 : i32, i32, i32
  }
  func.func @transform_1(%arg0: i32, %arg1: i32) -> (i32, i32, i32) {
    %c0_i32 = arith.constant 0 : i32
    %c0_i32_0 = arith.constant 0 : i32
    %c0_i32_1 = arith.constant 0 : i32
    return %arg0, %c0_i32, %c0_i32_0 : i32, i32, i32
  }
  func.func @transform_2(%arg0: i32, %arg1: i32) -> (i32, i32, i32) {
    %c0_i32 = arith.constant 0 : i32
    %c0_i32_0 = arith.constant 0 : i32
    %c0_i32_1 = arith.constant 0 : i32
    return %arg0, %c0_i32, %c0_i32_0 : i32, i32, i32
  }
}

module attributes {stable_mosaic.version = 11 : i64} {
  func.func @_normalize_kernel(%arg0: i32, %arg1: i32, %arg2: memref<1x4x256xf32, #tpu.memory_space<vmem>>, %arg3: memref<4x1xf32, #tpu.memory_space<vmem>>, %arg4: memref<4x1xf32, #tpu.memory_space<vmem>>, %arg5: memref<1x4x256xf32, #tpu.memory_space<vmem>>) attributes {dimension_semantics = [#tpu.dimension_semantics<parallel>, #tpu.dimension_semantics<parallel>], iteration_bounds = array<i64: 2, 1>, scalar_prefetch = 0 : i64, scratch_operands = 0 : i64, tpu.core_type = #tpu.core_type<tc>, window_params = [{transform_indices = @transform_0, window_bounds = array<i64: 1, 4, 256>}, {pipeline_mode = #tpu.pipeline_mode<synchronous>, transform_indices = @transform_1, window_bounds = array<i64: 4, 1>}, {pipeline_mode = #tpu.pipeline_mode<synchronous>, transform_indices = @transform_2, window_bounds = array<i64: 4, 1>}, {transform_indices = @transform_3, window_bounds = array<i64: 1, 4, 256>}]} {
    %c0 = arith.constant 0 : index
    %c0_0 = arith.constant 0 : index
    %c0_1 = arith.constant 0 : index
    %0 = vector.load %arg2[%c0, %c0_0, %c0_1] : memref<1x4x256xf32, #tpu.memory_space<vmem>>, vector<1x4x256xf32>
    %1 = vector.shape_cast %0 : vector<1x4x256xf32> to vector<4x256xf32>
    %c0_2 = arith.constant 0 : index
    %c0_3 = arith.constant 0 : index
    %2 = vector.load %arg3[%c0_2, %c0_3] : memref<4x1xf32, #tpu.memory_space<vmem>>, vector<4x1xf32>
    %3 = vector.broadcast %2 : vector<4x1xf32> to vector<4x256xf32>
    %4 = arith.mulf %1, %3 : vector<4x256xf32>
    %c0_4 = arith.constant 0 : index
    %c0_5 = arith.constant 0 : index
    %5 = vector.load %arg4[%c0_4, %c0_5] : memref<4x1xf32, #tpu.memory_space<vmem>>, vector<4x1xf32>
    %6 = vector.broadcast %5 : vector<4x1xf32> to vector<4x256xf32>
    %7 = arith.addf %4, %6 : vector<4x256xf32>
    %c0_6 = arith.constant 0 : index
    %c0_7 = arith.constant 0 : index
    %c0_8 = arith.constant 0 : index
    %8 = vector.load %arg5[%c0_6, %c0_7, %c0_8] : memref<1x4x256xf32, #tpu.memory_space<vmem>>, vector<1x4x256xf32>
    %9 = vector.shape_cast %8 : vector<1x4x256xf32> to vector<4x256xf32>
    %10 = vector.shape_cast %7 : vector<4x256xf32> to vector<1x4x256xf32>
    tpu.vector_store %arg5[%c0_6, %c0_7, %c0_8], %10 {strides = array<i32>} : memref<1x4x256xf32, #tpu.memory_space<vmem>>, vector<1x4x256xf32>,
    return
  }
  func.func @transform_0(%arg0: i32, %arg1: i32) -> (i32, i32, i32) {
    %c0_i32 = arith.constant 0 : i32
    %c0_i32_0 = arith.constant 0 : i32
    return %arg0, %c0_i32, %arg1 : i32, i32, i32
  }
  func.func @transform_1(%arg0: i32, %arg1: i32) -> (i32, i32) {
    %c0_i32 = arith.constant 0 : i32
    %c0_i32_0 = arith.constant 0 : i32
    %c0_i32_1 = arith.constant 0 : i32
    return %c0_i32, %c0_i32_0 : i32, i32
  }
  func.func @transform_2(%arg0: i32, %arg1: i32) -> (i32, i32) {
    %c0_i32 = arith.constant 0 : i32
    %c0_i32_0 = arith.constant 0 : i32
    %c0_i32_1 = arith.constant 0 : i32
    return %c0_i32, %c0_i32_0 : i32, i32
  }
  func.func @transform_3(%arg0: i32, %arg1: i32) -> (i32, i32, i32) {
    %c0_i32 = arith.constant 0 : i32
    %c0_i32_0 = arith.constant 0 : i32
    return %arg0, %c0_i32, %arg1 : i32, i32, i32
  }
}

</mosaic_0001>

<llo_original>
// kernel: batch_norm_sync_forward.3
$region0: #{batch_norm_sync_forward.3}
  #allocation0 [shape = 'u32[]', space=smem, size = 0x4, offset = 0x4, fixed_abs, tag = 'smem constant byte address 0x4 - core index']
  #allocation1 [shape = 'u32[144,128]{1,0:T(1,128)}', space=vmem, size = 0x12000, scoped, tag = 'internal scratch']
  %s0 = inlined_call_operand.vmem [shape: f32[2,4,256], index: 0, kind: input, shape index: {}]
  %s1 = inlined_call_operand.vmem [shape: f32[4,1], index: 1, kind: input, shape index: {}]
  %s2 = inlined_call_operand.vmem [shape: f32[4,1], index: 2, kind: input, shape index: {}]
  %s3 = inlined_call_operand.vmem [shape: f32[2,4,256], index: 3, kind: output, shape index: {}]
  %s4 = sld [smem:[#allocation0]]
  $region45: #{batch_norm_sync_forward.3} parent=0
    _
  %s6 = ssub.s32 1, %s4
  %s7 = scalar_select 0, %s6, %s4
  loop: start=0, step=1, limit=4
  $region2: #{batch_norm_sync_forward.3} parent=0 // loop_pre_header
    _
  $region3: #{batch_norm_sync_forward.3} parent=0 // loop_header
    %s9 = sphi 0, %s13
    %p10 = scmp.ge.s32.totalorder %s9, 4
    %s16 = sphi 0, %s28
    %s17 = sphi 0, %s24
    %s18 = sphi 0, %s16
    %s19 = sphi 0, %s17
    %s20 = sphi 0, %s18
    %s21 = sphi 0, %s19
    %s33 = sphi 0, %s35
    %s36 = sphi 0, %s33
    %s37 = sphi 0, %s36
    %s53 = sphi 0, %s37
    %s57 = sphi 0, %s57
    %s59 = sphi 0, %s57
    %s60 = sphi 0, %s59
    %s74 = sphi 0, %s60
    %s78 = sphi 0, %s78
    %s80 = sphi 0, %s78
    %s81 = sphi 0, %s80
    %s95 = sphi 0, %s81
    %s103 = sphi 0, %s105
    %s106 = sphi 0, %s103
    %s107 = sphi 0, %s106
    %s123 = sphi 0, %s107
  $region4: #{batch_norm_sync_forward.3} parent=0 // loop_header_branch
    %12 = sbr.rel (%p10) target = $region8
  $region5: #{batch_norm_sync_forward.3} parent=0 // loop_body
    %s14 = ssub.s32 %s9, 1
    %s15 = ssub.s32 %s9, 2
    %s22 = sadd.s32 1, %s17
    %p23 = scmp.ge.s32.totalorder %s22, 1
    %s24 = scalar_select %p23, 0, %s22
    %s25 = sadd.s32 1, %s16
    %s26 = scalar_select %p23, %s25, %s16
    %p27 = scmp.ge.s32.totalorder %s26, 2
    %s28 = scalar_select %p27, 0, %s26
    %s29 = ssub.s32 %s16, %s28
    %s30 = ssub.s32 %s17, %s24
    %s31 = sor.u32 %s29, %s30
    %p32 = scmp.eq.s32.totalorder %s31, 0
    %s34 = sadd.s32 %s33, 1
    %s35 = scalar_select %p32, %s33, %s34
    %p38 = pneg %p32
    %p39 = scmp.eq.s32.totalorder %s9, 1
    %p40 = por %p38, %p39
    %p41 = scmp.ne.s32.totalorder %s33, %s36
    %p42 = scmp.eq.s32.totalorder %s9, 0
    %p43 = por %p41, %p42
    %p44 = scmp.ne.s32.totalorder %s33, %s36
    %p45 = scmp.eq.s32.totalorder %s14, 1
    %p46 = por %p44, %p45
    %p47 = scmp.ne.s32.totalorder %s36, %s37
    %p48 = scmp.eq.s32.totalorder %s14, 0
    %p49 = por %p47, %p48
    %p50 = scmp.ne.s32.totalorder %s36, %s37
    %p51 = scmp.eq.s32.totalorder %s15, 1
    %p52 = por %p50, %p51
    %p54 = scmp.ne.s32.totalorder %s37, %s53
    %p55 = scmp.eq.s32.totalorder %s15, 0
    %p56 = por %p54, %p55
    %s58 = sadd.s32 %s57, 1
    %p61 = scmp.eq.s32.totalorder %s9, 1
    %p62 = scmp.ne.s32.totalorder %s57, %s59
    %p63 = scmp.eq.s32.totalorder %s9, 0
    %p64 = por %p62, %p63
    %p65 = scmp.ne.s32.totalorder %s57, %s59
    %p66 = scmp.eq.s32.totalorder %s14, 1
    %p67 = por %p65, %p66
    %p68 = scmp.ne.s32.totalorder %s59, %s60
    %p69 = scmp.eq.s32.totalorder %s14, 0
    %p70 = por %p68, %p69
    %p71 = scmp.ne.s32.totalorder %s59, %s60
    %p72 = scmp.eq.s32.totalorder %s15, 1
    %p73 = por %p71, %p72
    %p75 = scmp.ne.s32.totalorder %s60, %s74
    %p76 = scmp.eq.s32.totalorder %s15, 0
    %p77 = por %p75, %p76
    %s79 = sadd.s32 %s78, 1
    %p82 = scmp.eq.s32.totalorder %s9, 1
    %p83 = scmp.ne.s32.totalorder %s78, %s80
    %p84 = scmp.eq.s32.totalorder %s9, 0
    %p85 = por %p83, %p84
    %p86 = scmp.ne.s32.totalorder %s78, %s80
    %p87 = scmp.eq.s32.totalorder %s14, 1
    %p88 = por %p86, %p87
    %p89 = scmp.ne.s32.totalorder %s80, %s81
    %p90 = scmp.eq.s32.totalorder %s14, 0
    %p91 = por %p89, %p90
    %p92 = scmp.ne.s32.totalorder %s80, %s81
    %p93 = scmp.eq.s32.totalorder %s15, 1
    %p94 = por %p92, %p93
    %p96 = scmp.ne.s32.totalorder %s81, %s95
    %p97 = scmp.eq.s32.totalorder %s15, 0
    %p98 = por %p96, %p97
    %s99 = ssub.s32 %s16, %s28
    %s100 = ssub.s32 %s17, %s24
    %s101 = sor.u32 %s99, %s100
    %p102 = scmp.eq.s32.totalorder %s101, 0
    %s104 = sadd.s32 %s103, 1
    %s105 = scalar_select %p102, %s103, %s104
    %p108 = pneg %p102
    %p109 = scmp.eq.s32.totalorder %s9, 1
    %p110 = por %p108, %p109
    %p111 = scmp.ne.s32.totalorder %s103, %s106
    %p112 = scmp.eq.s32.totalorder %s9, 0
    %p113 = por %p111, %p112
    %p114 = scmp.ne.s32.totalorder %s103, %s106
    %p115 = scmp.eq.s32.totalorder %s14, 1
    %p116 = por %p114, %p115
    %p117 = scmp.ne.s32.totalorder %s106, %s107
    %p118 = scmp.eq.s32.totalorder %s14, 0
    %p119 = por %p117, %p118
    %p120 = scmp.ne.s32.totalorder %s106, %s107
    %p121 = scmp.eq.s32.totalorder %s15, 1
    %p122 = por %p120, %p121
    %p124 = scmp.ne.s32.totalorder %s107, %s123
    %p125 = scmp.eq.s32.totalorder %s15, 0
    %p126 = por %p124, %p125
    %p127 = scmp.le.s32.totalorder 1, %s9
    %p128 = scmp.lt.s32.totalorder %s9, 3
    %p129 = pnand %p127, %p128
    %p130 = pneg %p129
    // Predicated region
    $region9: #{batch_norm_sync_forward.3} parent=5 // pred_check
      _
    $region10: #{batch_norm_sync_forward.3} parent=5 // pred_check_branch
      %132 = sbr.rel (%p129) target = $region12
    $region11: #{batch_norm_sync_forward.3} parent=5 // pred_region
      %s133 = ssub.s32 %s9, 1
      // Predicated region
      $region13: #{batch_norm_sync_forward.3} parent=11 // pred_check
        %p134 = pneg %p70
      $region14: #{batch_norm_sync_forward.3} parent=11 // pred_check_branch
        %136 = sbr.rel (%p134) target = $region16
      $region15: #{batch_norm_sync_forward.3} parent=11 // pred_region
        _
      $region16: #{batch_norm_sync_forward.3} parent=11 // pred_fallthru
        _
      // Predicated region
      $region17: #{batch_norm_sync_forward.3} parent=11 // pred_check
        %p137 = pneg %p91
      $region18: #{batch_norm_sync_forward.3} parent=11 // pred_check_branch
        %139 = sbr.rel (%p137) target = $region20
      $region19: #{batch_norm_sync_forward.3} parent=11 // pred_region
        _
      $region20: #{batch_norm_sync_forward.3} parent=11 // pred_fallthru
        _
    $region12: #{batch_norm_sync_forward.3} parent=5 // pred_fallthru
      _
    %p140 = scmp.lt.s32.totalorder %s9, 2
    // Predicated region
    $region21: #{batch_norm_sync_forward.3} parent=5 // pred_check
      %p141 = pneg %p140
    $region22: #{batch_norm_sync_forward.3} parent=5 // pred_check_branch
      %143 = sbr.rel (%p141) target = $region24
    $region23: #{batch_norm_sync_forward.3} parent=5 // pred_region
      // Predicated region
      $region25: #{batch_norm_sync_forward.3} parent=23 // pred_check
        %p144 = pneg %p43
      $region26: #{batch_norm_sync_forward.3} parent=23 // pred_check_branch
        %146 = sbr.rel (%p144) target = $region28
      $region27: #{batch_norm_sync_forward.3} parent=23 // pred_region
        %s147 = smul.u32 2, %s17
        %p148 = scmp.lt.s32.totalorder %s16, 1
        %s149 = scalar_select %p148, %s16, 1
        %p150 = scmp.lt.s32.totalorder %s147, 1
        %s151 = scalar_select %p150, %s147, 1
        %s152 = smul.addr %s149, 2
        %s153 = sadd.s32 %s151, %s152
        %s154 = smul.addr %s153, 4
        %s155 = scalar_lea.vmem %s0, %s154
        %s156 = smul.u32 2, %s17
      $region28: #{batch_norm_sync_forward.3} parent=23 // pred_fallthru
        _
    $region24: #{batch_norm_sync_forward.3} parent=5 // pred_fallthru
      _
    %p157 = scmp.le.s32.totalorder 1, %s9
    %p158 = scmp.lt.s32.totalorder %s9, 3
    %p159 = pnand %p157, %p158
    %p160 = pneg %p159
    // Predicated region
    $region29: #{batch_norm_sync_forward.3} parent=5 // pred_check
      _
    $region30: #{batch_norm_sync_forward.3} parent=5 // pred_check_branch
      %162 = sbr.rel (%p159) target = $region32
    $region31: #{batch_norm_sync_forward.3} parent=5 // pred_region
      %s163 = ssub.s32 %s9, 1
      %s164 = smul.u32 2, %s19
      %p165 = scmp.lt.s32.totalorder %s18, 1
      %s166 = scalar_select %p165, %s18, 1
      %p167 = scmp.lt.s32.totalorder %s164, 1
      %s168 = scalar_select %p167, %s164, 1
      %s169 = smul.addr %s166, 2
      %s170 = sadd.s32 %s168, %s169
      %s171 = smul.addr %s170, 4
      %s172 = scalar_lea.vmem %s0, %s171
      %p173 = pneg %p49
      %p174 = pneg %p46
      %p175 = pneg %p70
      %p176 = pneg %p67
      %p177 = pneg %p91
      %p178 = pneg %p88
      %p179 = pneg %p119
      %p180 = pneg %p116
      %s181 = smul.u32 2, %s19
      %p182 = scmp.lt.s32.totalorder %s18, 1
      %s183 = scalar_select %p182, %s18, 1
      %p184 = scmp.lt.s32.totalorder %s181, 1
      %s185 = scalar_select %p184, %s181, 1
      %s186 = smul.addr %s183, 2
      %s187 = sadd.s32 %s185, %s186
      %s188 = smul.addr %s187, 4
      %s189 = scalar_lea.vmem %s3, %s188
      %s190 = smul.u32 2, %s19
      %p191 = scmp.lt.s32.totalorder %s18, 1
      %s192 = scalar_select %p191, %s18, 1
      %p193 = scmp.lt.s32.totalorder %s190, 1
      %s194 = scalar_select %p193, %s190, 1
      %s195 = smul.addr %s192, 2
      %s196 = sadd.s32 %s194, %s195
      %s197 = smul.addr %s196, 4
      %s198 = scalar_lea.vmem %s0, %s197
      %s199 = smul.u32 2, %s19
      %s200 = smul.u32 2, %s19
      %p201 = scmp.lt.s32.totalorder %s18, 1
      %s202 = scalar_select %p201, %s18, 1
      %p203 = scmp.lt.s32.totalorder %s200, 1
      %s204 = scalar_select %p203, %s200, 1
      %s205 = smul.addr %s202, 2
      %s206 = sadd.s32 %s204, %s205
      %s207 = smul.addr %s206, 4
      %s208 = scalar_lea.vmem %s3, %s207
      %s209 = smul.u32 2, %s19
      %v210 = vld [vmem:[%s198] sm:$0xff]
      %v211 = vld [vmem:[%s1] sm:$0xf]
      %213 = vset.pattern.permute.xlu0 0
      %214 = vperm.xlu0 %213, %v211
      %v215 = vpop.permute.xlu0 %214
      %v217 = vunpack.c.l.s4 839922192
      %v218 = vunpack.c.0.s8 %v217
      %v219 = vlaneseq
      %v220 = vshrl.u32 %v219, 7
      %v221 = vsub.s32 %v218, %v220
      %v222 = vrot.slane %v215, %v221
      %v224 = vmul.f32 %v210, %v222
      %v225 = vld [vmem:[%s2] sm:$0xf]
      %227 = vset.pattern.permute.xlu0 0
      %228 = vperm.xlu0 %227, %v225
      %v229 = vpop.permute.xlu0 %228
      %v231 = vunpack.c.l.s4 839922192
      %v232 = vunpack.c.0.s8 %v231
      %v233 = vlaneseq
      %v234 = vshrl.u32 %v233, 7
      %v235 = vsub.s32 %v232, %v234
      %v236 = vrot.slane %v229, %v235
      %v238 = vadd.f32 %v224, %v236
      %239 = vst [vmem:[%s208] sm:$0xff] %v238
      %s240 = smul.u32 2, %s19
      %p241 = scmp.lt.s32.totalorder %s18, 1
      %s242 = scalar_select %p241, %s18, 1
      %p243 = scmp.lt.s32.totalorder %s240, 1
      %s244 = scalar_select %p243, %s240, 1
      %s245 = smul.addr %s242, 2
      %s246 = sadd.s32 %s244, %s245
      %s247 = smul.addr %s246, 4
      %s248 = scalar_lea.vmem %s3, %s247
      // Predicated region
      $region33: #{batch_norm_sync_forward.3} parent=31 // pred_check
        %p249 = pneg %p116
      $region34: #{batch_norm_sync_forward.3} parent=31 // pred_check_branch
        %251 = sbr.rel (%p249) target = $region36
      $region35: #{batch_norm_sync_forward.3} parent=31 // pred_region
        %s252 = smul.u32 2, %s19
      $region36: #{batch_norm_sync_forward.3} parent=31 // pred_fallthru
        _
    $region32: #{batch_norm_sync_forward.3} parent=5 // pred_fallthru
      _
    %p253 = scmp.le.s32.totalorder 2, %s9
    // Predicated region
    $region37: #{batch_norm_sync_forward.3} parent=5 // pred_check
      %p254 = pneg %p253
    $region38: #{batch_norm_sync_forward.3} parent=5 // pred_check_branch
      %256 = sbr.rel (%p254) target = $region40
    $region39: #{batch_norm_sync_forward.3} parent=5 // pred_region
      %s257 = ssub.s32 %s9, 2
      // Predicated region
      $region41: #{batch_norm_sync_forward.3} parent=39 // pred_check
        %p258 = pneg %p122
      $region42: #{batch_norm_sync_forward.3} parent=39 // pred_check_branch
        %260 = sbr.rel (%p258) target = $region44
      $region43: #{batch_norm_sync_forward.3} parent=39 // pred_region
        %s261 = smul.u32 2, %s21
        %p262 = scmp.lt.s32.totalorder %s20, 1
        %s263 = scalar_select %p262, %s20, 1
        %p264 = scmp.lt.s32.totalorder %s261, 1
        %s265 = scalar_select %p264, %s261, 1
        %s266 = smul.addr %s263, 2
        %s267 = sadd.s32 %s265, %s266
        %s268 = smul.addr %s267, 4
        %s269 = scalar_lea.vmem %s3, %s268
      $region44: #{batch_norm_sync_forward.3} parent=39 // pred_fallthru
        _
    $region40: #{batch_norm_sync_forward.3} parent=5 // pred_fallthru
      _
  $region6: #{batch_norm_sync_forward.3} parent=0 // loop_footer
    %s13 = sadd.s32 1, %s9
  $region7: #{batch_norm_sync_forward.3} parent=0 // loop_footer_branch
    %8 = sbr.rel target = $region3
  $region8: #{batch_norm_sync_forward.3} parent=0 // loop_exit
    _

// kernel: batch_norm_sync_forward.2
$region0: #{batch_norm_sync_forward.2}
  #allocation0 [shape = 'u32[]', space=smem, size = 0x4, offset = 0x4, fixed_abs, tag = 'smem constant byte address 0x4 - core index']
  #allocation1 [shape = 'u32[144,128]{1,0:T(1,128)}', space=vmem, size = 0x12000, scoped, tag = 'internal scratch']
  %s0 = inlined_call_operand.vmem [shape: f32[2,4,256], index: 0, kind: input, shape index: {}]
  %s1 = inlined_call_operand.vmem [shape: f32[2,4,128], index: 1, kind: output, shape index: {0}]
  %s2 = inlined_call_operand.vmem [shape: f32[2,4,128], index: 2, kind: output, shape index: {1}]
  %3 = xla_tuple %s1, %s2
  %s4 = sld [smem:[#allocation0]]
  $region49: #{batch_norm_sync_forward.2} parent=0
    _
  %s6 = ssub.s32 1, %s4
  %s7 = scalar_select 0, %s6, %s4
  loop: start=0, step=1, limit=4
  $region2: #{batch_norm_sync_forward.2} parent=0 // loop_pre_header
    _
  $region3: #{batch_norm_sync_forward.2} parent=0 // loop_header
    %s9 = sphi 0, %s13
    %p10 = scmp.ge.s32.totalorder %s9, 4
    %s16 = sphi 0, %s28
    %s17 = sphi 0, %s24
    %s18 = sphi 0, %s16
    %s19 = sphi 0, %s17
    %s20 = sphi 0, %s18
    %s21 = sphi 0, %s19
    %s33 = sphi 0, %s35
    %s36 = sphi 0, %s33
    %s37 = sphi 0, %s36
    %s53 = sphi 0, %s37
    %s59 = sphi 0, %s61
    %s62 = sphi 0, %s59
    %s63 = sphi 0, %s62
    %s79 = sphi 0, %s63
    %s85 = sphi 0, %s87
    %s88 = sphi 0, %s85
    %s89 = sphi 0, %s88
    %s105 = sphi 0, %s89
  $region4: #{batch_norm_sync_forward.2} parent=0 // loop_header_branch
    %12 = sbr.rel (%p10) target = $region8
  $region5: #{batch_norm_sync_forward.2} parent=0 // loop_body
    %s14 = ssub.s32 %s9, 1
    %s15 = ssub.s32 %s9, 2
    %s22 = sadd.s32 1, %s17
    %p23 = scmp.ge.s32.totalorder %s22, 1
    %s24 = scalar_select %p23, 0, %s22
    %s25 = sadd.s32 1, %s16
    %s26 = scalar_select %p23, %s25, %s16
    %p27 = scmp.ge.s32.totalorder %s26, 2
    %s28 = scalar_select %p27, 0, %s26
    %s29 = ssub.s32 %s16, %s28
    %s30 = ssub.s32 %s17, %s24
    %s31 = sor.u32 %s29, %s30
    %p32 = scmp.eq.s32.totalorder %s31, 0
    %s34 = sadd.s32 %s33, 1
    %s35 = scalar_select %p32, %s33, %s34
    %p38 = pneg %p32
    %p39 = scmp.eq.s32.totalorder %s9, 1
    %p40 = por %p38, %p39
    %p41 = scmp.ne.s32.totalorder %s33, %s36
    %p42 = scmp.eq.s32.totalorder %s9, 0
    %p43 = por %p41, %p42
    %p44 = scmp.ne.s32.totalorder %s33, %s36
    %p45 = scmp.eq.s32.totalorder %s14, 1
    %p46 = por %p44, %p45
    %p47 = scmp.ne.s32.totalorder %s36, %s37
    %p48 = scmp.eq.s32.totalorder %s14, 0
    %p49 = por %p47, %p48
    %p50 = scmp.ne.s32.totalorder %s36, %s37
    %p51 = scmp.eq.s32.totalorder %s15, 1
    %p52 = por %p50, %p51
    %p54 = scmp.ne.s32.totalorder %s37, %s53
    %p55 = scmp.eq.s32.totalorder %s15, 0
    %p56 = por %p54, %p55
    %s57 = ssub.s32 %s16, %s28
    %p58 = scmp.eq.s32.totalorder %s57, 0
    %s60 = sadd.s32 %s59, 1
    %s61 = scalar_select %p58, %s59, %s60
    %p64 = pneg %p58
    %p65 = scmp.eq.s32.totalorder %s9, 1
    %p66 = por %p64, %p65
    %p67 = scmp.ne.s32.totalorder %s59, %s62
    %p68 = scmp.eq.s32.totalorder %s9, 0
    %p69 = por %p67, %p68
    %p70 = scmp.ne.s32.totalorder %s59, %s62
    %p71 = scmp.eq.s32.totalorder %s14, 1
    %p72 = por %p70, %p71
    %p73 = scmp.ne.s32.totalorder %s62, %s63
    %p74 = scmp.eq.s32.totalorder %s14, 0
    %p75 = por %p73, %p74
    %p76 = scmp.ne.s32.totalorder %s62, %s63
    %p77 = scmp.eq.s32.totalorder %s15, 1
    %p78 = por %p76, %p77
    %p80 = scmp.ne.s32.totalorder %s63, %s79
    %p81 = scmp.eq.s32.totalorder %s15, 0
    %p82 = por %p80, %p81
    %s83 = ssub.s32 %s16, %s28
    %p84 = scmp.eq.s32.totalorder %s83, 0
    %s86 = sadd.s32 %s85, 1
    %s87 = scalar_select %p84, %s85, %s86
    %p90 = pneg %p84
    %p91 = scmp.eq.s32.totalorder %s9, 1
    %p92 = por %p90, %p91
    %p93 = scmp.ne.s32.totalorder %s85, %s88
    %p94 = scmp.eq.s32.totalorder %s9, 0
    %p95 = por %p93, %p94
    %p96 = scmp.ne.s32.totalorder %s85, %s88
    %p97 = scmp.eq.s32.totalorder %s14, 1
    %p98 = por %p96, %p97
    %p99 = scmp.ne.s32.totalorder %s88, %s89
    %p100 = scmp.eq.s32.totalorder %s14, 0
    %p101 = por %p99, %p100
    %p102 = scmp.ne.s32.totalorder %s88, %s89
    %p103 = scmp.eq.s32.totalorder %s15, 1
    %p104 = por %p102, %p103
    %p106 = scmp.ne.s32.totalorder %s89, %s105
    %p107 = scmp.eq.s32.totalorder %s15, 0
    %p108 = por %p106, %p107
    %p109 = scmp.le.s32.totalorder 1, %s9
    %p110 = scmp.lt.s32.totalorder %s9, 3
    %p111 = pnand %p109, %p110
    %p112 = pneg %p111
    // Predicated region
    $region9: #{batch_norm_sync_forward.2} parent=5 // pred_check
      _
    $region10: #{batch_norm_sync_forward.2} parent=5 // pred_check_branch
      %114 = sbr.rel (%p111) target = $region12
    $region11: #{batch_norm_sync_forward.2} parent=5 // pred_region
      %s115 = ssub.s32 %s9, 1
    $region12: #{batch_norm_sync_forward.2} parent=5 // pred_fallthru
      _
    %p116 = scmp.lt.s32.totalorder %s9, 2
    // Predicated region
    $region13: #{batch_norm_sync_forward.2} parent=5 // pred_check
      %p117 = pneg %p116
    $region14: #{batch_norm_sync_forward.2} parent=5 // pred_check_branch
      %119 = sbr.rel (%p117) target = $region16
    $region15: #{batch_norm_sync_forward.2} parent=5 // pred_region
      // Predicated region
      $region17: #{batch_norm_sync_forward.2} parent=15 // pred_check
        %p120 = pneg %p43
      $region18: #{batch_norm_sync_forward.2} parent=15 // pred_check_branch
        %122 = sbr.rel (%p120) target = $region20
      $region19: #{batch_norm_sync_forward.2} parent=15 // pred_region
        %s123 = smul.u32 2, %s17
        %p124 = scmp.lt.s32.totalorder %s16, 1
        %s125 = scalar_select %p124, %s16, 1
        %p126 = scmp.lt.s32.totalorder %s123, 1
        %s127 = scalar_select %p126, %s123, 1
        %s128 = smul.addr %s125, 2
        %s129 = sadd.s32 %s127, %s128
        %s130 = smul.addr %s129, 4
        %s131 = scalar_lea.vmem %s0, %s130
        %s132 = smul.u32 2, %s17
      $region20: #{batch_norm_sync_forward.2} parent=15 // pred_fallthru
        _
    $region16: #{batch_norm_sync_forward.2} parent=5 // pred_fallthru
      _
    %p133 = scmp.le.s32.totalorder 1, %s9
    %p134 = scmp.lt.s32.totalorder %s9, 3
    %p135 = pnand %p133, %p134
    %p136 = pneg %p135
    // Predicated region
    $region21: #{batch_norm_sync_forward.2} parent=5 // pred_check
      _
    $region22: #{batch_norm_sync_forward.2} parent=5 // pred_check_branch
      %138 = sbr.rel (%p135) target = $region24
    $region23: #{batch_norm_sync_forward.2} parent=5 // pred_region
      %s139 = ssub.s32 %s9, 1
      %s140 = smul.u32 2, %s19
      %p141 = scmp.lt.s32.totalorder %s18, 1
      %s142 = scalar_select %p141, %s18, 1
      %p143 = scmp.lt.s32.totalorder %s140, 1
      %s144 = scalar_select %p143, %s140, 1
      %s145 = smul.addr %s142, 2
      %s146 = sadd.s32 %s144, %s145
      %s147 = smul.addr %s146, 4
      %s148 = scalar_lea.vmem %s0, %s147
      %p149 = pneg %p49
      %p150 = pneg %p46
      %p151 = pneg %p75
      %p152 = pneg %p72
      %p153 = scmp.lt.s32.totalorder %s18, 1
      %s154 = scalar_select %p153, %s18, 1
      %s155 = smul.addr %s154, 4
      %s156 = scalar_lea.vmem %s1, %s155
      %p157 = pneg %p101
      %p158 = pneg %p98
      %p159 = scmp.lt.s32.totalorder %s18, 1
      %s160 = scalar_select %p159, %s18, 1
      %s161 = smul.addr %s160, 4
      %s162 = scalar_lea.vmem %s2, %s161
      %s163 = smul.u32 2, %s19
      %p164 = scmp.lt.s32.totalorder %s18, 1
      %s165 = scalar_select %p164, %s18, 1
      %p166 = scmp.lt.s32.totalorder %s163, 1
      %s167 = scalar_select %p166, %s163, 1
      %s168 = smul.addr %s165, 2
      %s169 = sadd.s32 %s167, %s168
      %s170 = smul.addr %s169, 4
      %s171 = scalar_lea.vmem %s0, %s170
      %s172 = smul.u32 2, %s19
      %p173 = scmp.lt.s32.totalorder %s18, 1
      %s174 = scalar_select %p173, %s18, 1
      %s175 = smul.addr %s174, 4
      %s176 = scalar_lea.vmem %s1, %s175
      %p177 = scmp.lt.s32.totalorder %s18, 1
      %s178 = scalar_select %p177, %s18, 1
      %s179 = smul.addr %s178, 4
      %s180 = scalar_lea.vmem %s2, %s179
      %p181 = scmp.eq.s32.totalorder %s19, 0
      // Predicated region
      $region25: #{batch_norm_sync_forward.2} parent=23 // pred_check
        %p182 = pneg %p181
      $region26: #{batch_norm_sync_forward.2} parent=23 // pred_check_branch
        %184 = sbr.rel (%p182) target = $region28
      $region27: #{batch_norm_sync_forward.2} parent=23 // pred_region
        %185 = vst [vmem:[%s176] sm:$0xf] 0.0
        %186 = vst [vmem:[%s180] sm:$0xf] 0.0
      $region28: #{batch_norm_sync_forward.2} parent=23 // pred_fallthru
        _
      %v187 = vld [vmem:[%s171] sm:$0xff]
      %v188 = vmul.f32 %v187, %v187
      %v190 = vrot.slane %v187, 4
      %v192 = vadd.f32 %v187, %v190
      %v193 = vmul.f32 %v190, %v190
      %v194 = vadd.f32 %v188, %v193
      %v195 = vld [vmem:[%s176] sm:$0xf]
      %v196 = vadd.f32 %v195, %v192
      %197 = vst [vmem:[%s176] sm:$0xf] %v196
      %v198 = vld [vmem:[%s180] sm:$0xf]
      %v199 = vadd.f32 %v198, %v194
      %200 = vst [vmem:[%s180] sm:$0xf] %v199
      %p201 = scmp.lt.s32.totalorder %s18, 1
      %s202 = scalar_select %p201, %s18, 1
      %s203 = smul.addr %s202, 4
      %s204 = scalar_lea.vmem %s1, %s203
      %p205 = scmp.lt.s32.totalorder %s18, 1
      %s206 = scalar_select %p205, %s18, 1
      %s207 = smul.addr %s206, 4
      %s208 = scalar_lea.vmem %s2, %s207
      // Predicated region
      $region29: #{batch_norm_sync_forward.2} parent=23 // pred_check
        %p209 = pneg %p72
      $region30: #{batch_norm_sync_forward.2} parent=23 // pred_check_branch
        %211 = sbr.rel (%p209) target = $region32
      $region31: #{batch_norm_sync_forward.2} parent=23 // pred_region
        _
      $region32: #{batch_norm_sync_forward.2} parent=23 // pred_fallthru
        _
      // Predicated region
      $region33: #{batch_norm_sync_forward.2} parent=23 // pred_check
        %p212 = pneg %p98
      $region34: #{batch_norm_sync_forward.2} parent=23 // pred_check_branch
        %214 = sbr.rel (%p212) target = $region36
      $region35: #{batch_norm_sync_forward.2} parent=23 // pred_region
        _
      $region36: #{batch_norm_sync_forward.2} parent=23 // pred_fallthru
        _
    $region24: #{batch_norm_sync_forward.2} parent=5 // pred_fallthru
      _
    %p215 = scmp.le.s32.totalorder 2, %s9
    // Predicated region
    $region37: #{batch_norm_sync_forward.2} parent=5 // pred_check
      %p216 = pneg %p215
    $region38: #{batch_norm_sync_forward.2} parent=5 // pred_check_branch
      %218 = sbr.rel (%p216) target = $region40
    $region39: #{batch_norm_sync_forward.2} parent=5 // pred_region
      %s219 = ssub.s32 %s9, 2
      // Predicated region
      $region41: #{batch_norm_sync_forward.2} parent=39 // pred_check
        %p220 = pneg %p78
      $region42: #{batch_norm_sync_forward.2} parent=39 // pred_check_branch
        %222 = sbr.rel (%p220) target = $region44
      $region43: #{batch_norm_sync_forward.2} parent=39 // pred_region
        %p223 = scmp.lt.s32.totalorder %s20, 1
        %s224 = scalar_select %p223, %s20, 1
        %s225 = smul.addr %s224, 4
        %s226 = scalar_lea.vmem %s1, %s225
      $region44: #{batch_norm_sync_forward.2} parent=39 // pred_fallthru
        _
      // Predicated region
      $region45: #{batch_norm_sync_forward.2} parent=39 // pred_check
        %p227 = pneg %p104
      $region46: #{batch_norm_sync_forward.2} parent=39 // pred_check_branch
        %229 = sbr.rel (%p227) target = $region48
      $region47: #{batch_norm_sync_forward.2} parent=39 // pred_region
        %p230 = scmp.lt.s32.totalorder %s20, 1
        %s231 = scalar_select %p230, %s20, 1
        %s232 = smul.addr %s231, 4
        %s233 = scalar_lea.vmem %s2, %s232
      $region48: #{batch_norm_sync_forward.2} parent=39 // pred_fallthru
        _
    $region40: #{batch_norm_sync_forward.2} parent=5 // pred_fallthru
      _
  $region6: #{batch_norm_sync_forward.2} parent=0 // loop_footer
    %s13 = sadd.s32 1, %s9
  $region7: #{batch_norm_sync_forward.2} parent=0 // loop_footer_branch
    %8 = sbr.rel target = $region3
  $region8: #{batch_norm_sync_forward.2} parent=0 // loop_exit
    _

</llo_original>
